<compile_context>
chip_gen: v5e
topology: v5e:2x2
jax: 0.10.0
libtpu: 0.0.40
codegen_flags: <defaults>
</compile_context>

<pallas_src>
import functools
import math

import jax
import jax.numpy as jnp
from jax.experimental import pallas as pl
from jax.experimental.pallas import tpu as pltpu


# Preferred tile sizes: sized so double-buffered inputs + the f32 accumulator
# stay well under the v7x 64 MiB VMEM (v5e/v6e have extra headroom).
_TM, _TN, _TK = 256, 256, 512


def _tile(dim, pref):
    """Use `pref` if it evenly divides `dim`, otherwise fall back to the full dim."""
    return pref if dim % pref == 0 else dim


# --------------------------- Linear: y = x @ W^T + b -------------------------
def _linear_kernel(x_ref, w_ref, b_ref, o_ref, acc_ref, *, activation):
    k = pl.program_id(2)

    @pl.when(k == 0)
    def _():
        acc_ref[...] = jnp.zeros_like(acc_ref)

    acc_ref[...] += jnp.dot(x_ref[...], w_ref[...],
                            preferred_element_type=jnp.float32)

    @pl.when(k == pl.num_programs(2) - 1)
    def _():
        out = acc_ref[...] + b_ref[...]
        if activation == "relu":
            out = jnp.maximum(out, 0.0)
        o_ref[...] = out.astype(o_ref.dtype)


def linear(x2d, weight, bias, activation=None):
    """nn.Linear semantics.  x2d: [M, In], weight: [Out, In] (PyTorch), bias: [Out]."""
    M, K = x2d.shape
    N, K2 = weight.shape
    assert K == K2
    wt = weight.T                       # one-time wrapper-side transpose -> [In, Out]
    b2d = bias.reshape(1, N)
    tm, tn, tk = _tile(M, _TM), _tile(N, _TN), _tile(K, _TK)
    # TODO(synk): cast x/wt to bf16 (fp8 on v7x) at real model sizes; kept f32
    # here so the small-shape numerical check stays tight.
    return pl.pallas_call(
        functools.partial(_linear_kernel, activation=activation),
        out_shape=jax.ShapeDtypeStruct((M, N), x2d.dtype),
        grid=(M // tm, N // tn, K // tk),
        in_specs=[
            pl.BlockSpec((tm, tk), lambda i, j, k: (i, k)),
            pl.BlockSpec((tk, tn), lambda i, j, k: (k, j)),
            pl.BlockSpec((1, tn), lambda i, j, k: (0, j)),
        ],
        out_specs=pl.BlockSpec((tm, tn), lambda i, j, k: (i, j)),
        scratch_shapes=[pltpu.VMEM((tm, tn), jnp.float32)],
        compiler_params=pltpu.CompilerParams(
            dimension_semantics=("parallel", "parallel", "arbitrary")),
        cost_estimate=pl.CostEstimate(
            flops=2 * M * K * N, transcendentals=0,
            bytes_accessed=4 * (M * K + K * N + M * N + N)),
    )(x2d, wt, b2d)


# --------------------------- Scaled-dot-product attention --------------------
def _attention_kernel(q_ref, k_ref, v_ref, o_ref, *, scale):
    q = q_ref[...]                      # (S, d_k)
    k = k_ref[...]                      # (S, d_k)
    v = v_ref[...]                      # (S, d_k)
    # scores = q @ k^T expressed as a contraction over d_k (no transposed tile).
    s = jax.lax.dot_general(q, k, (((1,), (1,)), ((), ())),
                            preferred_element_type=jnp.float32) * scale
    m = jnp.max(s, axis=-1, keepdims=True)
    p = jnp.exp(s - m)
    p = p / jnp.sum(p, axis=-1, keepdims=True)
    o = jnp.dot(p, v, preferred_element_type=jnp.float32)
    o_ref[...] = o.astype(o_ref.dtype)
    # TODO(synk): optional attention mask (masked_fill) path not implemented.


def attention(qh, kh, vh):
    """qh/kh/vh: (B, H, S, d_k) -> (B, H, S, d_k)."""
    B, H, S, d_k = qh.shape
    in_spec = pl.BlockSpec((None, None, S, d_k), lambda b, h: (b, h, 0, 0))
    # TODO(synk): at real sequence lengths switch to a flash-attention style
    # kv-tiled online softmax; here the whole (S, d_k) head fits one VMEM tile.
    return pl.pallas_call(
        functools.partial(_attention_kernel, scale=1.0 / math.sqrt(d_k)),
        out_shape=jax.ShapeDtypeStruct((B, H, S, d_k), qh.dtype),
        grid=(B, H),
        in_specs=[in_spec, in_spec, in_spec],
        out_specs=pl.BlockSpec((None, None, S, d_k), lambda b, h: (b, h, 0, 0)),
        compiler_params=pltpu.CompilerParams(
            dimension_semantics=("parallel", "parallel")),
    )(qh, kh, vh)


# --------------------------- Residual add + LayerNorm ------------------------
def _add_layernorm_kernel(x_ref, y_ref, g_ref, b_ref, o_ref, *, eps):
    z = x_ref[...] + y_ref[...]
    mean = jnp.mean(z, axis=-1, keepdims=True)
    zc = z - mean
    var = jnp.mean(zc * zc, axis=-1, keepdims=True)
    inv = jax.lax.rsqrt(var + eps)
    o_ref[...] = (zc * inv * g_ref[...] + b_ref[...]).astype(o_ref.dtype)


def add_layernorm(x2d, y2d, gamma, beta, eps=1e-5):
    M, D = x2d.shape
    tm = _tile(M, _TM)
    row = pl.BlockSpec((tm, D), lambda i: (i, 0))
    vec = pl.BlockSpec((1, D), lambda i: (0, 0))
    return pl.pallas_call(
        functools.partial(_add_layernorm_kernel, eps=eps),
        out_shape=jax.ShapeDtypeStruct((M, D), x2d.dtype),
        grid=(M // tm,),
        in_specs=[row, row, vec, vec],
        out_specs=pl.BlockSpec((tm, D), lambda i: (i, 0)),
        compiler_params=pltpu.CompilerParams(dimension_semantics=("parallel",)),
    )(x2d, y2d, gamma.reshape(1, D), beta.reshape(1, D))


# --------------------------- TransformerBlock forward ------------------------
def transformer_block_forward(x, p, num_heads, eps=1e-5):
    B, S, D = x.shape
    d_k = D // num_heads
    x2d = x.reshape(B * S, D)

    q = linear(x2d, p["wq"], p["bq"])
    k = linear(x2d, p["wk"], p["bk"])
    v = linear(x2d, p["wv"], p["bv"])

    def split_heads(t):                 # wrapper-side layout plumbing only
        return t.reshape(B, S, num_heads, d_k).transpose(0, 2, 1, 3)

    ctx = attention(split_heads(q), split_heads(k), split_heads(v))
    ctx = ctx.transpose(0, 2, 1, 3).reshape(B * S, D)
    attn_out = linear(ctx, p["wo"], p["bo"])

    # nn.Dropout is identity at inference.  TODO(synk): training-mode dropout.
    h1 = add_layernorm(x2d, attn_out, p["g1"], p["beta1"], eps)

    ff = linear(h1, p["w1"], p["b1"], activation="relu")
    ff = linear(ff, p["w2"], p["b2"])
    out = add_layernorm(h1, ff, p["g2"], p["beta2"], eps)
    return out.reshape(B, S, D)


# --------------------------- Pure-JAX reference -------------------------------
def reference_forward(x, p, num_heads, eps=1e-5):
    B, S, D = x.shape
    d_k = D // num_heads
    lin = lambda t, w, b: t @ w.T + b

    def heads(t):
        return t.reshape(B, S, num_heads, d_k).transpose(0, 2, 1, 3)

    q, k, v = (heads(lin(x, p["wq"], p["bq"])),
               heads(lin(x, p["wk"], p["bk"])),
               heads(lin(x, p["wv"], p["bv"])))
    s = jnp.einsum("bhqd,bhkd->bhqk", q, k) / math.sqrt(d_k)
    a = jax.nn.softmax(s, axis=-1)
    ctx = jnp.einsum("bhqk,bhkd->bhqd", a, v).transpose(0, 2, 1, 3).reshape(B, S, D)
    attn_out = lin(ctx, p["wo"], p["bo"])

    def ln(z, g, b):
        m = jnp.mean(z, axis=-1, keepdims=True)
        var = jnp.mean((z - m) ** 2, axis=-1, keepdims=True)
        return (z - m) * jax.lax.rsqrt(var + eps) * g + b

    h1 = ln(x + attn_out, p["g1"], p["beta1"])
    ff = lin(jnp.maximum(lin(h1, p["w1"], p["b1"]), 0.0), p["w2"], p["b2"])
    return ln(h1 + ff, p["g2"], p["beta2"])


if __name__ == "__main__":
    batch, seq, d_model, num_heads, d_ff = 2, 16, 128, 4, 256

    key = jax.random.PRNGKey(0)
    keys = jax.random.split(key, 17)

    def lin_init(kw, kb, out_f, in_f):
        bound = 1.0 / math.sqrt(in_f)
        w = jax.random.uniform(kw, (out_f, in_f), jnp.float32, -bound, bound)
        b = jax.random.uniform(kb, (out_f,), jnp.float32, -bound, bound)
        return w, b

    params = {}
    params["wq"], params["bq"] = lin_init(keys[0], keys[1], d_model, d_model)
    params["wk"], params["bk"] = lin_init(keys[2], keys[3], d_model, d_model)
    params["wv"], params["bv"] = lin_init(keys[4], keys[5], d_model, d_model)
    params["wo"], params["bo"] = lin_init(keys[6], keys[7], d_model, d_model)
    params["w1"], params["b1"] = lin_init(keys[8], keys[9], d_ff, d_model)
    params["w2"], params["b2"] = lin_init(keys[10], keys[11], d_model, d_ff)
    params["g1"] = 1.0 + 0.1 * jax.random.normal(keys[12], (d_model,), jnp.float32)
    params["beta1"] = 0.1 * jax.random.normal(keys[13], (d_model,), jnp.float32)
    params["g2"] = 1.0 + 0.1 * jax.random.normal(keys[14], (d_model,), jnp.float32)
    params["beta2"] = 0.1 * jax.random.normal(keys[15], (d_model,), jnp.float32)

    x = jax.random.normal(keys[16], (batch, seq, d_model), jnp.float32)

    y = transformer_block_forward(x, params, num_heads)
    jax.block_until_ready(y)

    with jax.default_matmul_precision("highest"):
        y_ref = reference_forward(x, params, num_heads)
    jax.block_until_ready(y_ref)

    assert y.shape == (batch, seq, d_model)
    assert jnp.allclose(y, y_ref, atol=5e-3, rtol=5e-3), (
        float(jnp.max(jnp.abs(y - y_ref))))

    print("KERNEL_OK")
</pallas_src>

<mosaic_0001>
module attributes {stable_mosaic.version = 11 : i64} {
  func.func @_linear_kernel(%arg0: i32, %arg1: i32, %arg2: i32, %arg3: memref<32x128xf32, #tpu.memory_space<vmem>>, %arg4: memref<128x128xf32, #tpu.memory_space<vmem>>, %arg5: memref<1x128xf32, #tpu.memory_space<vmem>>, %arg6: memref<32x128xf32, #tpu.memory_space<vmem>>, %arg7: memref<32x128xf32, #tpu.memory_space<vmem>>) attributes {dimension_semantics = [#tpu.dimension_semantics<parallel>, #tpu.dimension_semantics<parallel>, #tpu.dimension_semantics<arbitrary>], iteration_bounds = array<i64: 1, 1, 1>, scalar_prefetch = 0 : i64, scratch_operands = 1 : i64, tpu.core_type = #tpu.core_type<tc>, window_params = [{transform_indices = @transform_0, window_bounds = array<i64: 32, 128>}, {transform_indices = @transform_1, window_bounds = array<i64: 128, 128>}, {transform_indices = @transform_2, window_bounds = array<i64: 1, 128>}, {transform_indices = @transform_3, window_bounds = array<i64: 32, 128>}]} {
    %c0_i32 = arith.constant 0 : i32
    %0 = arith.cmpi eq, %arg2, %c0_i32 : i32
    %1 = arith.extui %0 : i1 to i32
    %c0_i32_0 = arith.constant 0 : i32
    %2 = arith.cmpi ne, %1, %c0_i32_0 : i32
    scf.if %2 {
      %cst_10 = arith.constant 0.000000e+00 : f32
      %12 = vector.broadcast %cst_10 : f32 to vector<32x128xf32>
      %c0_11 = arith.constant 0 : index
      %c0_12 = arith.constant 0 : index
      %13 = vector.load %arg7[%c0_11, %c0_12] : memref<32x128xf32, #tpu.memory_space<vmem>>, vector<32x128xf32>
      tpu.vector_store %arg7[%c0_11, %c0_12], %12 {strides = array<i32>} : memref<32x128xf32, #tpu.memory_space<vmem>>, vector<32x128xf32>,
    } else {
    }
    %c0 = arith.constant 0 : index
    %c0_1 = arith.constant 0 : index
    %3 = vector.load %arg7[%c0, %c0_1] : memref<32x128xf32, #tpu.memory_space<vmem>>, vector<32x128xf32>
    %c0_2 = arith.constant 0 : index
    %c0_3 = arith.constant 0 : index
    %4 = vector.load %arg3[%c0_2, %c0_3] : memref<32x128xf32, #tpu.memory_space<vmem>>, vector<32x128xf32>
    %c0_4 = arith.constant 0 : index
    %c0_5 = arith.constant 0 : index
    %5 = vector.load %arg4[%c0_4, %c0_5] : memref<128x128xf32, #tpu.memory_space<vmem>>, vector<128x128xf32>
    %cst = arith.constant dense<0.000000e+00> : vector<32x128xf32>
    %6 = tpu.matmul %4, %5, %cst {dimension_numbers = #tpu.dot_dimension_numbers<[1], [0], [0], [1], [0, 0, 1, 1], [], []>} : vector<32x128xf32>, vector<128x128xf32>, vector<32x128xf32> -> vector<32x128xf32>
    %7 = arith.addf %3, %6 : vector<32x128xf32>
    %c0_6 = arith.constant 0 : index
    %c0_7 = arith.constant 0 : index
    %8 = vector.load %arg7[%c0_6, %c0_7] : memref<32x128xf32, #tpu.memory_space<vmem>>, vector<32x128xf32>
    tpu.vector_store %arg7[%c0_6, %c0_7], %7 {strides = array<i32>} : memref<32x128xf32, #tpu.memory_space<vmem>>, vector<32x128xf32>,
    %c0_i32_8 = arith.constant 0 : i32
    %9 = arith.cmpi eq, %arg2, %c0_i32_8 : i32
    %10 = arith.extui %9 : i1 to i32
    %c0_i32_9 = arith.constant 0 : i32
    %11 = arith.cmpi ne, %10, %c0_i32_9 : i32
    scf.if %11 {
      %c0_10 = arith.constant 0 : index
      %c0_11 = arith.constant 0 : index
      %12 = vector.load %arg7[%c0_10, %c0_11] : memref<32x128xf32, #tpu.memory_space<vmem>>, vector<32x128xf32>
      %c0_12 = arith.constant 0 : index
      %c0_13 = arith.constant 0 : index
      %13 = vector.load %arg5[%c0_12, %c0_13] : memref<1x128xf32, #tpu.memory_space<vmem>>, vector<1x128xf32>
      %14 = vector.broadcast %13 : vector<1x128xf32> to vector<32x128xf32>
      %15 = arith.addf %12, %14 : vector<32x128xf32>
      %c0_14 = arith.constant 0 : index
      %c0_15 = arith.constant 0 : index
      %16 = vector.load %arg6[%c0_14, %c0_15] : memref<32x128xf32, #tpu.memory_space<vmem>>, vector<32x128xf32>
      tpu.vector_store %arg6[%c0_14, %c0_15], %15 {strides = array<i32>} : memref<32x128xf32, #tpu.memory_space<vmem>>, vector<32x128xf32>,
    } else {
    }
    return
  }
  func.func @transform_0(%arg0: i32, %arg1: i32, %arg2: i32) -> (i32, i32) {
    %c0_i32 = arith.constant 0 : i32
    return %arg0, %arg2 : i32, i32
  }
  func.func @transform_1(%arg0: i32, %arg1: i32, %arg2: i32) -> (i32, i32) {
    %c0_i32 = arith.constant 0 : i32
    return %arg2, %arg1 : i32, i32
  }
  func.func @transform_2(%arg0: i32, %arg1: i32, %arg2: i32) -> (i32, i32) {
    %c0_i32 = arith.constant 0 : i32
    %c0_i32_0 = arith.constant 0 : i32
    return %c0_i32, %arg1 : i32, i32
  }
  func.func @transform_3(%arg0: i32, %arg1: i32, %arg2: i32) -> (i32, i32) {
    %c0_i32 = arith.constant 0 : i32
    return %arg0, %arg1 : i32, i32
  }
}

</mosaic_0001>

<llo_original>
// kernel: tpu_custom_call.1
$region0: #{tpu_custom_call.1}
  #allocation0 [shape = 'u32[]', space=smem, size = 0x4, offset = 0x4, fixed_abs, tag = 'smem constant byte address 0x4 - core index']
  #allocation1 [shape = 'u32[72,128]{1,0:T(1,128)}', space=vmem, size = 0x9000, scoped, tag = 'internal scratch']
  #allocation2 [shape = 'f32[32,128]{1,0:T(8,128)}', space=vmem, size = 0x4000, scoped, tag = 'scratch operand']
  %s0 = inlined_call_operand.hbm [shape: f32[32,128], index: 0, kind: input, shape index: {}]
  %s1 = inlined_call_operand.hbm [shape: f32[128,128], index: 1, kind: input, shape index: {}]
  %s2 = inlined_call_operand.vmem [shape: f32[1,128], index: 2, kind: input, shape index: {}]
  %s3 = inlined_call_operand.hbm [shape: f32[32,128], index: 3, kind: output, shape index: {}]
  %s4 = sld [smem:[#allocation0]]
  $region38: #{tpu_custom_call.1} parent=0
    _
  %s6 = ssub.s32 1, %s4
  %s7 = scalar_select 0, %s6, %s4
  $region1: #{tpu_custom_call.1} parent=0
    #allocation3 [shape = 'u8[16384]{0}', space=vmem, size = 0x4000, scoped, tag = 'input window, operand 0, single buffered']
    #allocation4 [shape = 's32[1]{0}', space=sflag, size = 0x4, scoped, tag = 'scoped memory for tpu_custom_call.1']
    #allocation5 [shape = 's32[1]{0}', space=sflag, size = 0x4, scoped, tag = 'scoped memory for tpu_custom_call.1']
    #allocation6 [shape = 'u8[65536]{0}', space=vmem, size = 0x10000, scoped, tag = 'input window, operand 1, single buffered']
    #allocation7 [shape = 's32[1]{0}', space=sflag, size = 0x4, scoped, tag = 'scoped memory for tpu_custom_call.1']
    #allocation8 [shape = 'u8[16384]{0}', space=vmem, size = 0x4000, scoped, tag = 'output window, operand 0, single buffered']
    %8 = vsyncpa [#allocation4], 0
    %9 = vsyncpa [#allocation7], 0
    %10 = vsyncpa [#allocation5], 0
    // Predicated region
    $region2: #{tpu_custom_call.1} parent=1 // pred_check
      _
    $region3: #{tpu_custom_call.1} parent=1 // pred_check_branch
      %12 = sbr.rel (0) target = $region5
    $region4: #{tpu_custom_call.1} parent=1 // pred_region
      %14 = vsyncadd [#allocation4], 0
      %s15 = sshll.u32 %s0, 4
      %s16 = int_to_ptr.hbm [resolvable:$true] %s15
      %s17 = sshll.u32 [#allocation3], 4
      %s18 = int_to_ptr.vmem [resolvable:$true] %s17
      %23 = dma.hbm_to_vmem [thread:$0]  %s16, 512, %s18, [#allocation4], 128, 128, 8
    $region5: #{tpu_custom_call.1} parent=1 // pred_fallthru
      _
    // Predicated region
    $region6: #{tpu_custom_call.1} parent=1 // pred_check
      _
    $region7: #{tpu_custom_call.1} parent=1 // pred_check_branch
      %25 = sbr.rel (0) target = $region9
    $region8: #{tpu_custom_call.1} parent=1 // pred_region
      %27 = vsyncadd [#allocation7], 0
      %s28 = sshll.u32 %s1, 4
      %s29 = int_to_ptr.hbm [resolvable:$true] %s28
      %s30 = sshll.u32 [#allocation6], 4
      %s31 = int_to_ptr.vmem [resolvable:$true] %s30
      %36 = dma.hbm_to_vmem [thread:$0]  %s29, 2048, %s31, [#allocation7], 128, 128, 8
    $region9: #{tpu_custom_call.1} parent=1 // pred_fallthru
      _
    // Predicated region
    $region10: #{tpu_custom_call.1} parent=1 // pred_check
      _
    $region11: #{tpu_custom_call.1} parent=1 // pred_check_branch
      %38 = sbr.rel (0) target = $region13
    $region12: #{tpu_custom_call.1} parent=1 // pred_region
      _
    $region13: #{tpu_custom_call.1} parent=1 // pred_fallthru
      _
    // Predicated region
    $region14: #{tpu_custom_call.1} parent=1 // pred_check
      _
    $region15: #{tpu_custom_call.1} parent=1 // pred_check_branch
      %40 = sbr.rel (0) target = $region17
    $region16: #{tpu_custom_call.1} parent=1 // pred_region
      %42 = dma.done [#allocation4], 512
    $region17: #{tpu_custom_call.1} parent=1 // pred_fallthru
      _
    // Predicated region
    $region18: #{tpu_custom_call.1} parent=1 // pred_check
      _
    $region19: #{tpu_custom_call.1} parent=1 // pred_check_branch
      %44 = sbr.rel (0) target = $region21
    $region20: #{tpu_custom_call.1} parent=1 // pred_region
      %46 = dma.done [#allocation7], 2048
    $region21: #{tpu_custom_call.1} parent=1 // pred_fallthru
      _
    %p47 = scmp.eq.s32.totalorder 0, 0
    // Predicated region
    $region22: #{tpu_custom_call.1} parent=1 // pred_check
      %p48 = pneg %p47
    $region23: #{tpu_custom_call.1} parent=1 // pred_check_branch
      %50 = sbr.rel (%p48) target = $region25
    $region24: #{tpu_custom_call.1} parent=1 // pred_region
      %51 = vst [vmem:[#allocation2] sm:$0xff] 0.0
      %52 = vst [vmem:[#allocation2 + $0x8] sm:$0xff] 0.0
      %53 = vst [vmem:[#allocation2 + $0x10] sm:$0xff] 0.0
      %54 = vst [vmem:[#allocation2 + $0x18] sm:$0xff] 0.0
    $region25: #{tpu_custom_call.1} parent=1 // pred_fallthru
      _
    %v55 = vld [vmem:[#allocation2] sm:$0xff]
    %v56 = vld [vmem:[#allocation2 + $0x8] sm:$0xff]
    %v57 = vld [vmem:[#allocation2 + $0x10] sm:$0xff]
    %v58 = vld [vmem:[#allocation2 + $0x18] sm:$0xff]
    %v59 = vld [vmem:[#allocation3] sm:$0xff]
    %v60 = vld [vmem:[#allocation3 + $0x8] sm:$0xff]
    %v61 = vld [vmem:[#allocation3 + $0x10] sm:$0xff]
    %v62 = vld [vmem:[#allocation3 + $0x18] sm:$0xff]
    %v63 = vld [vmem:[#allocation6] sm:$0xff]
    %v64 = vld [vmem:[#allocation6 + $0x8] sm:$0xff]
    %v65 = vld [vmem:[#allocation6 + $0x10] sm:$0xff]
    %v66 = vld [vmem:[#allocation6 + $0x18] sm:$0xff]
    %v67 = vld [vmem:[#allocation6 + $0x20] sm:$0xff]
    %v68 = vld [vmem:[#allocation6 + $0x28] sm:$0xff]
    %v69 = vld [vmem:[#allocation6 + $0x30] sm:$0xff]
    %v70 = vld [vmem:[#allocation6 + $0x38] sm:$0xff]
    %v71 = vld [vmem:[#allocation6 + $0x40] sm:$0xff]
    %v72 = vld [vmem:[#allocation6 + $0x48] sm:$0xff]
    %v73 = vld [vmem:[#allocation6 + $0x50] sm:$0xff]
    %v74 = vld [vmem:[#allocation6 + $0x58] sm:$0xff]
    %v75 = vld [vmem:[#allocation6 + $0x60] sm:$0xff]
    %v76 = vld [vmem:[#allocation6 + $0x68] sm:$0xff]
    %v77 = vld [vmem:[#allocation6 + $0x70] sm:$0xff]
    %v78 = vld [vmem:[#allocation6 + $0x78] sm:$0xff]
    %79 = vmatpush.msra.mxu0 %v78
    %80 = vmatpush.msra.mxu0 %v77
    %81 = vmatpush.msra.mxu0 %v76
    %82 = vmatpush.msra.mxu0 %v75
    %83 = vmatpush.msra.mxu0 %v74
    %84 = vmatpush.msra.mxu0 %v73
    %85 = vmatpush.msra.mxu0 %v72
    %86 = vmatpush.msra.mxu0 %v71
    %87 = vmatpush.msra.mxu0 %v70
    %88 = vmatpush.msra.mxu0 %v69
    %89 = vmatpush.msra.mxu0 %v68
    %90 = vmatpush.msra.mxu0 %v67
    %91 = vmatpush.msra.mxu0 %v66
    %92 = vmatpush.msra.mxu0 %v65
    %93 = vmatpush.msra.mxu0 %v64
    %94 = vmatpush.msra.mxu0 %v63
    %95 = vmatmul.f32.gmra.mxu0 %v59
    %v96 = vpop.f32.mrf.mxu0
    %v97 = vadd.f32 0.0, %v96
    %98 = vmatmul.f32.gmra.mxu0 %v60
    %v99 = vpop.f32.mrf.mxu0
    %v100 = vadd.f32 0.0, %v99
    %101 = vmatmul.f32.gmra.mxu0 %v61
    %v102 = vpop.f32.mrf.mxu0
    %v103 = vadd.f32 0.0, %v102
    %104 = vmatmul.f32.gmra.mxu0 %v62
    %v105 = vpop.f32.mrf.mxu0
    %v106 = vadd.f32 0.0, %v105
    %107 = vdwg.mxu0
    %v108 = vadd.f32 %v55, %v97
    %v109 = vadd.f32 %v56, %v100
    %v110 = vadd.f32 %v57, %v103
    %v111 = vadd.f32 %v58, %v106
    %112 = vst [vmem:[#allocation2] sm:$0xff] %v108
    %113 = vst [vmem:[#allocation2 + $0x8] sm:$0xff] %v109
    %114 = vst [vmem:[#allocation2 + $0x10] sm:$0xff] %v110
    %115 = vst [vmem:[#allocation2 + $0x18] sm:$0xff] %v111
    // Predicated region
    $region26: #{tpu_custom_call.1} parent=1 // pred_check
      %p116 = pneg %p47
    $region27: #{tpu_custom_call.1} parent=1 // pred_check_branch
      %118 = sbr.rel (%p116) target = $region29
    $region28: #{tpu_custom_call.1} parent=1 // pred_region
      %v119 = vld [vmem:[#allocation2] sm:$0xff]
      %v120 = vld [vmem:[#allocation2 + $0x8] sm:$0xff]
      %v121 = vld [vmem:[#allocation2 + $0x10] sm:$0xff]
      %v122 = vld [vmem:[#allocation2 + $0x18] sm:$0xff]
      %v123 = vld [vmem:[%s2] sm:$0x1]
      %v125 = vperm.slane %v123, 0
      %v127 = vadd.f32 %v119, %v125
      %v128 = vadd.f32 %v120, %v125
      %v129 = vadd.f32 %v121, %v125
      %v130 = vadd.f32 %v122, %v125
      %131 = vst [vmem:[#allocation8] sm:$0xff] %v127
      %132 = vst [vmem:[#allocation8 + $0x8] sm:$0xff] %v128
      %133 = vst [vmem:[#allocation8 + $0x10] sm:$0xff] %v129
      %134 = vst [vmem:[#allocation8 + $0x18] sm:$0xff] %v130
    $region29: #{tpu_custom_call.1} parent=1 // pred_fallthru
      _
    // Predicated region
    $region30: #{tpu_custom_call.1} parent=1 // pred_check
      _
    $region31: #{tpu_custom_call.1} parent=1 // pred_check_branch
      %136 = sbr.rel (0) target = $region33
    $region32: #{tpu_custom_call.1} parent=1 // pred_region
      %138 = vsyncadd [#allocation5], 0
      %s139 = sshll.u32 [#allocation8], 4
      %s140 = int_to_ptr.vmem [resolvable:$true] %s139
      %s141 = sshll.u32 %s3, 4
      %s142 = int_to_ptr.hbm [resolvable:$true] %s141
      %147 = dma.vmem_to_hbm [thread:$0]  %s140, 512, %s142, [#allocation5], 128, 128, 8
    $region33: #{tpu_custom_call.1} parent=1 // pred_fallthru
      _
    // Predicated region
    $region34: #{tpu_custom_call.1} parent=1 // pred_check
      _
    $region35: #{tpu_custom_call.1} parent=1 // pred_check_branch
      %149 = sbr.rel (0) target = $region37
    $region36: #{tpu_custom_call.1} parent=1 // pred_region
      %151 = dma.done [#allocation5], 512
    $region37: #{tpu_custom_call.1} parent=1 // pred_fallthru
      _
    %152 = vsyncpa [#allocation4], 1
    %153 = vsyncpa [#allocation7], 1
    %154 = vsyncpa [#allocation5], 1

</llo_original>
